<compile_context>
chip_gen: v5e
topology: v5e:2x2
jax: 0.10.0
libtpu: 0.0.40
codegen_flags: <defaults>
</compile_context>

<pallas_src>
import functools

import jax
import jax.numpy as jnp
from jax.experimental import pallas as pl
from jax.experimental.pallas import tpu as pltpu

SUBLANE = 8


def _round_up(x, m):
    return (x + m - 1) // m * m


def mlp_kernel(x_ref, w1_ref, b1_ref, w2_ref, b2_ref, w3_ref, b3_ref, o_ref):
    # Cast the activation tile in VMEM (free) instead of in the wrapper.
    x = x_ref[...].astype(w1_ref.dtype)
    # Layer 1: Linear + ReLU (MXU matmul, f32 accumulate, f32 bias+ReLU).
    h = jnp.dot(x, w1_ref[...], preferred_element_type=jnp.float32)
    h = jnp.maximum(h + b1_ref[...], 0.0)
    # Layer 2: Linear + ReLU.
    h = jnp.dot(h.astype(w2_ref.dtype), w2_ref[...],
                preferred_element_type=jnp.float32)
    h = jnp.maximum(h + b2_ref[...], 0.0)
    # Output layer: Linear + ReLU (activation after the final layer matches
    # the PyTorch module's behavior when `activations` is a string).
    h = jnp.dot(h.astype(w3_ref.dtype), w3_ref[...],
                preferred_element_type=jnp.float32)
    o_ref[...] = jnp.maximum(h + b3_ref[...], 0.0).astype(o_ref.dtype)


def prepare_params(params, param_dtype=jnp.float32):
    """One-time conversion of PyTorch-layout params [(W(out,in), b(out,)), ...]:
      * W transposed to (in, out) so the hot path is plain x @ W on the MXU,
      * biases reshaped to (1, out), kept f32 (bias+ReLU epilogue stays f32).
    No lane padding: feature dims are small and the kernel is HBM-bound.
    """
    flat = []
    for w, b in params:
        flat.append(jnp.asarray(w.T, param_dtype))
        flat.append(jnp.asarray(b, jnp.float32).reshape(1, -1))
    return tuple(flat)


@functools.partial(jax.jit, static_argnames=("block_m",))
def mlp_forward(x, w1, b1, w2, b2, w3, b3, *, block_m=None):
    batch, in_dim = x.shape
    h1 = w1.shape[1]
    h2 = w2.shape[1]
    out_dim = w3.shape[1]

    # Batch tile: aim for ~8 grid steps (amortizes per-step overhead, keeps
    # both v7x TensorCores fed), capped at 8192 rows so double-buffered f32
    # x/out tiles plus hidden intermediates stay well under v5e's 16 MiB
    # scoped-VMEM default (and v7x's 32 MiB default / 64 MiB physical).
    if block_m is None:
        if batch <= SUBLANE:
            block_m = batch                       # single full-array tile
        else:
            block_m = min(_round_up(pl.cdiv(batch, 8), SUBLANE), 8192)
            block_m = min(block_m, _round_up(batch, SUBLANE))
    grid = (pl.cdiv(batch, block_m),)

    return pl.pallas_call(
        mlp_kernel,
        # Exact logical shape: no lane padding, no post-kernel slice.
        out_shape=jax.ShapeDtypeStruct((batch, out_dim), jnp.float32),
        grid=grid,
        in_specs=[
            # activations: tiled over the batch (double-buffered by Pallas);
            # ragged last block is read-padded / write-masked automatically.
            pl.BlockSpec((block_m, in_dim), lambda i: (i, 0)),
            # weights & biases: constant index_map -> VMEM resident.
            pl.BlockSpec((in_dim, h1), lambda i: (0, 0)),
            pl.BlockSpec((1, h1), lambda i: (0, 0)),
            pl.BlockSpec((h1, h2), lambda i: (0, 0)),
            pl.BlockSpec((1, h2), lambda i: (0, 0)),
            pl.BlockSpec((h2, out_dim), lambda i: (0, 0)),
            pl.BlockSpec((1, out_dim), lambda i: (0, 0)),
        ],
        out_specs=pl.BlockSpec((block_m, out_dim), lambda i: (i, 0)),
        compiler_params=pltpu.CompilerParams(
            dimension_semantics=("parallel",)),   # megacore / 2 TCs on v7x
    )(x, w1, b1, w2, b2, w3, b3)


def init_linear(key, in_dim, out_dim):
    # Deterministic init mimicking torch.nn.Linear: U(-1/sqrt(fan_in), ...).
    kw, kb = jax.random.split(key)
    bound = 1.0 / jnp.sqrt(in_dim)
    w = jax.random.uniform(kw, (out_dim, in_dim), jnp.float32, -bound, bound)
    b = jax.random.uniform(kb, (out_dim,), jnp.float32, -bound, bound)
    return w, b


def reference_forward(x, params):
    h = x
    for w, b in params:
        h = jnp.maximum(h @ w.T + b, 0.0)
    return h


if __name__ == "__main__":
    input_dim, hidden_dims, output_dim = 32, [64, 64], 16

    key = jax.random.PRNGKey(0)
    kx, k1, k2, k3 = jax.random.split(key, 4)

    params = [
        init_linear(k1, input_dim, hidden_dims[0]),
        init_linear(k2, hidden_dims[0], hidden_dims[1]),
        init_linear(k3, hidden_dims[1], output_dim),
    ]

    # fp32 path (default): tight tolerance vs. the pure-JAX reference.
    x = jax.random.normal(kx, (16, input_dim), jnp.float32)
    ref = reference_forward(x, params)
    prepped_f32 = prepare_params(params, param_dtype=jnp.float32)
    out = jax.block_until_ready(mlp_forward(x, *prepped_f32))
    assert out.shape == (16, output_dim)
    assert jnp.allclose(out, ref, atol=1e-5, rtol=1e-5)

    # Ragged batch (not a multiple of the tile): Pallas masks the last block's
    # out-of-bounds writes; out_shape is exactly (batch, out_dim).
    x_rag = x[:13]
    out_rag = jax.block_until_ready(mlp_forward(x_rag, *prepped_f32))
    assert out_rag.shape == (13, output_dim)
    assert jnp.allclose(out_rag, ref[:13], atol=1e-5, rtol=1e-5)

    # Optional bf16 weight/activation path (f32 accumulate + f32 bias/ReLU):
    # halves HBM/VMEM traffic, native bf16 MXU path on v6e/v7x.
    prepped_bf16 = prepare_params(params, param_dtype=jnp.bfloat16)
    out_bf16 = jax.block_until_ready(mlp_forward(x, *prepped_bf16))
    assert out_bf16.shape == (16, output_dim)
    assert jnp.allclose(out_bf16, ref, atol=1e-1, rtol=1e-1)

    print("KERNEL_OK")
</pallas_src>

<mosaic_0001>
module attributes {stable_mosaic.version = 11 : i64} {
  func.func @mlp_kernel(%arg0: i32, %arg1: memref<8x32xf32, #tpu.memory_space<vmem>>, %arg2: memref<32x64xf32, #tpu.memory_space<vmem>>, %arg3: memref<1x64xf32, #tpu.memory_space<vmem>>, %arg4: memref<64x64xf32, #tpu.memory_space<vmem>>, %arg5: memref<1x64xf32, #tpu.memory_space<vmem>>, %arg6: memref<64x16xf32, #tpu.memory_space<vmem>>, %arg7: memref<1x16xf32, #tpu.memory_space<vmem>>, %arg8: memref<8x16xf32, #tpu.memory_space<vmem>>) attributes {dimension_semantics = [#tpu.dimension_semantics<parallel>], iteration_bounds = array<i64: 2>, scalar_prefetch = 0 : i64, scratch_operands = 0 : i64, tpu.core_type = #tpu.core_type<tc>, window_params = [{transform_indices = @transform_0, window_bounds = array<i64: 8, 32>}, {pipeline_mode = #tpu.pipeline_mode<synchronous>, transform_indices = @transform_1, window_bounds = array<i64: 32, 64>}, {pipeline_mode = #tpu.pipeline_mode<synchronous>, transform_indices = @transform_2, window_bounds = array<i64: 1, 64>}, {pipeline_mode = #tpu.pipeline_mode<synchronous>, transform_indices = @transform_3, window_bounds = array<i64: 64, 64>}, {pipeline_mode = #tpu.pipeline_mode<synchronous>, transform_indices = @transform_4, window_bounds = array<i64: 1, 64>}, {pipeline_mode = #tpu.pipeline_mode<synchronous>, transform_indices = @transform_5, window_bounds = array<i64: 64, 16>}, {pipeline_mode = #tpu.pipeline_mode<synchronous>, transform_indices = @transform_6, window_bounds = array<i64: 1, 16>}, {transform_indices = @transform_7, window_bounds = array<i64: 8, 16>}]} {
    %c0 = arith.constant 0 : index
    %c0_0 = arith.constant 0 : index
    %0 = vector.load %arg1[%c0, %c0_0] : memref<8x32xf32, #tpu.memory_space<vmem>>, vector<8x32xf32>
    %c0_1 = arith.constant 0 : index
    %c0_2 = arith.constant 0 : index
    %1 = vector.load %arg2[%c0_1, %c0_2] : memref<32x64xf32, #tpu.memory_space<vmem>>, vector<32x64xf32>
    %cst = arith.constant dense<0.000000e+00> : vector<8x64xf32>
    %2 = tpu.matmul %0, %1, %cst {dimension_numbers = #tpu.dot_dimension_numbers<[1], [0], [0], [1], [0, 0, 1, 1], [], []>} : vector<8x32xf32>, vector<32x64xf32>, vector<8x64xf32> -> vector<8x64xf32>
    %c0_3 = arith.constant 0 : index
    %c0_4 = arith.constant 0 : index
    %3 = vector.load %arg3[%c0_3, %c0_4] : memref<1x64xf32, #tpu.memory_space<vmem>>, vector<1x64xf32>
    %4 = vector.broadcast %3 : vector<1x64xf32> to vector<8x64xf32>
    %5 = arith.addf %2, %4 : vector<8x64xf32>
    %cst_5 = arith.constant 0.000000e+00 : f32
    %6 = vector.broadcast %cst_5 : f32 to vector<8x64xf32>
    %7 = arith.maximumf %5, %6 : vector<8x64xf32>
    %c0_6 = arith.constant 0 : index
    %c0_7 = arith.constant 0 : index
    %8 = vector.load %arg4[%c0_6, %c0_7] : memref<64x64xf32, #tpu.memory_space<vmem>>, vector<64x64xf32>
    %cst_8 = arith.constant dense<0.000000e+00> : vector<8x64xf32>
    %9 = tpu.matmul %7, %8, %cst_8 {dimension_numbers = #tpu.dot_dimension_numbers<[1], [0], [0], [1], [0, 0, 1, 1], [], []>} : vector<8x64xf32>, vector<64x64xf32>, vector<8x64xf32> -> vector<8x64xf32>
    %c0_9 = arith.constant 0 : index
    %c0_10 = arith.constant 0 : index
    %10 = vector.load %arg5[%c0_9, %c0_10] : memref<1x64xf32, #tpu.memory_space<vmem>>, vector<1x64xf32>
    %11 = vector.broadcast %10 : vector<1x64xf32> to vector<8x64xf32>
    %12 = arith.addf %9, %11 : vector<8x64xf32>
    %cst_11 = arith.constant 0.000000e+00 : f32
    %13 = vector.broadcast %cst_11 : f32 to vector<8x64xf32>
    %14 = arith.maximumf %12, %13 : vector<8x64xf32>
    %c0_12 = arith.constant 0 : index
    %c0_13 = arith.constant 0 : index
    %15 = vector.load %arg6[%c0_12, %c0_13] : memref<64x16xf32, #tpu.memory_space<vmem>>, vector<64x16xf32>
    %cst_14 = arith.constant dense<0.000000e+00> : vector<8x16xf32>
    %16 = tpu.matmul %14, %15, %cst_14 {dimension_numbers = #tpu.dot_dimension_numbers<[1], [0], [0], [1], [0, 0, 1, 1], [], []>} : vector<8x64xf32>, vector<64x16xf32>, vector<8x16xf32> -> vector<8x16xf32>
    %c0_15 = arith.constant 0 : index
    %c0_16 = arith.constant 0 : index
    %17 = vector.load %arg7[%c0_15, %c0_16] : memref<1x16xf32, #tpu.memory_space<vmem>>, vector<1x16xf32>
    %18 = vector.broadcast %17 : vector<1x16xf32> to vector<8x16xf32>
    %19 = arith.addf %16, %18 : vector<8x16xf32>
    %cst_17 = arith.constant 0.000000e+00 : f32
    %20 = vector.broadcast %cst_17 : f32 to vector<8x16xf32>
    %21 = arith.maximumf %19, %20 : vector<8x16xf32>
    %c0_18 = arith.constant 0 : index
    %c0_19 = arith.constant 0 : index
    %22 = vector.load %arg8[%c0_18, %c0_19] : memref<8x16xf32, #tpu.memory_space<vmem>>, vector<8x16xf32>
    tpu.vector_store %arg8[%c0_18, %c0_19], %21 {strides = array<i32>} : memref<8x16xf32, #tpu.memory_space<vmem>>, vector<8x16xf32>,
    return
  }
  func.func @transform_0(%arg0: i32) -> (i32, i32) {
    %c0_i32 = arith.constant 0 : i32
    %c0_i32_0 = arith.constant 0 : i32
    return %arg0, %c0_i32 : i32, i32
  }
  func.func @transform_1(%arg0: i32) -> (i32, i32) {
    %c0_i32 = arith.constant 0 : i32
    %c0_i32_0 = arith.constant 0 : i32
    %c0_i32_1 = arith.constant 0 : i32
    return %c0_i32, %c0_i32_0 : i32, i32
  }
  func.func @transform_2(%arg0: i32) -> (i32, i32) {
    %c0_i32 = arith.constant 0 : i32
    %c0_i32_0 = arith.constant 0 : i32
    %c0_i32_1 = arith.constant 0 : i32
    return %c0_i32, %c0_i32_0 : i32, i32
  }
  func.func @transform_3(%arg0: i32) -> (i32, i32) {
    %c0_i32 = arith.constant 0 : i32
    %c0_i32_0 = arith.constant 0 : i32
    %c0_i32_1 = arith.constant 0 : i32
    return %c0_i32, %c0_i32_0 : i32, i32
  }
  func.func @transform_4(%arg0: i32) -> (i32, i32) {
    %c0_i32 = arith.constant 0 : i32
    %c0_i32_0 = arith.constant 0 : i32
    %c0_i32_1 = arith.constant 0 : i32
    return %c0_i32, %c0_i32_0 : i32, i32
  }
  func.func @transform_5(%arg0: i32) -> (i32, i32) {
    %c0_i32 = arith.constant 0 : i32
    %c0_i32_0 = arith.constant 0 : i32
    %c0_i32_1 = arith.constant 0 : i32
    return %c0_i32, %c0_i32_0 : i32, i32
  }
  func.func @transform_6(%arg0: i32) -> (i32, i32) {
    %c0_i32 = arith.constant 0 : i32
    %c0_i32_0 = arith.constant 0 : i32
    %c0_i32_1 = arith.constant 0 : i32
    return %c0_i32, %c0_i32_0 : i32, i32
  }
  func.func @transform_7(%arg0: i32) -> (i32, i32) {
    %c0_i32 = arith.constant 0 : i32
    %c0_i32_0 = arith.constant 0 : i32
    return %arg0, %c0_i32 : i32, i32
  }
}

</mosaic_0001>

<llo_original>
// kernel: mlp_forward.1
$region0: #{mlp_forward.1}
  #allocation0 [shape = 'u32[]', space=smem, size = 0x4, offset = 0x4, fixed_abs, tag = 'smem constant byte address 0x4 - core index']
  #allocation1 [shape = 'u32[72,128]{1,0:T(1,128)}', space=vmem, size = 0x9000, scoped, tag = 'internal scratch']
  %s0 = inlined_call_operand.vmem [shape: f32[16,32], index: 0, kind: input, shape index: {}]
  %s1 = inlined_call_operand.hbm [shape: f32[32,64], index: 1, kind: input, shape index: {}]
  %s2 = inlined_call_operand.vmem [shape: f32[1,64], index: 2, kind: input, shape index: {}]
  %s3 = inlined_call_operand.vmem [shape: f32[64,64], index: 3, kind: input, shape index: {}]
  %s4 = inlined_call_operand.vmem [shape: f32[1,64], index: 4, kind: input, shape index: {}]
  %s5 = inlined_call_operand.vmem [shape: f32[64,16], index: 5, kind: input, shape index: {}]
  %s6 = inlined_call_operand.vmem [shape: f32[1,16], index: 6, kind: input, shape index: {}]
  %s7 = inlined_call_operand.hbm [shape: f32[16,16], index: 7, kind: output, shape index: {}]
  %s8 = sld [smem:[#allocation0]]
  $region65: #{mlp_forward.1} parent=0
    _
  %s10 = ssub.s32 1, %s8
  %s11 = scalar_select 0, %s10, %s8
  $region1: #{mlp_forward.1} parent=0
    #allocation2 [shape = 'u8[16384]{0}', space=vmem, size = 0x4000, scoped, tag = 'input window, operand 1, single buffered']
    #allocation3 [shape = 's32[2]{0}', space=sflag, size = 0x8, scoped, tag = 'scoped memory for mlp_forward.1']
    #allocation4 [shape = 's32[2]{0}', space=sflag, size = 0x8, scoped, tag = 'scoped memory for mlp_forward.1']
    #allocation5 [shape = 'u8[8192]{0}', space=vmem, size = 0x2000, scoped, tag = 'output window, operand 0']
    %12 = vsyncpa [#allocation3], 0
    %13 = vsyncpa [#allocation4], 0
    %s14 = scalar_lea.sflag [#allocation4], 1
    %15 = vsyncpa %s14, 0
    loop: start=0, step=1, limit=4
    $region2: #{mlp_forward.1} parent=1 // loop_pre_header
      _
    $region3: #{mlp_forward.1} parent=1 // loop_header
      %s17 = sphi 0, %s21
      %p18 = scmp.ge.s32.totalorder %s17, 4
      %s27 = sphi 0, %s29
      %s30 = sphi 0, %s27
      %s31 = sphi 0, %s30
      %s47 = sphi 0, %s31
      %s51 = sphi 0, %s51
      %s53 = sphi 0, %s51
      %s54 = sphi 0, %s53
      %s68 = sphi 0, %s54
      %s72 = sphi 0, %s72
      %s74 = sphi 0, %s72
      %s75 = sphi 0, %s74
      %s89 = sphi 0, %s75
      %s93 = sphi 0, %s93
      %s95 = sphi 0, %s93
      %s96 = sphi 0, %s95
      %s110 = sphi 0, %s96
      %s114 = sphi 0, %s114
      %s116 = sphi 0, %s114
      %s117 = sphi 0, %s116
      %s131 = sphi 0, %s117
      %s135 = sphi 0, %s135
      %s137 = sphi 0, %s135
      %s138 = sphi 0, %s137
      %s152 = sphi 0, %s138
      %s156 = sphi 0, %s156
      %s158 = sphi 0, %s156
      %s159 = sphi 0, %s158
      %s173 = sphi 0, %s159
      %s179 = sphi 0, %s181
      %s182 = sphi 0, %s179
      %s183 = sphi 0, %s182
      %s199 = sphi 0, %s183
    $region4: #{mlp_forward.1} parent=1 // loop_header_branch
      %20 = sbr.rel (%p18) target = $region8
    $region5: #{mlp_forward.1} parent=1 // loop_body
      %s22 = ssub.s32 %s17, 1
      %s23 = ssub.s32 %s17, 2
      %s24 = sadd.s32 %s17, 1
      %s25 = ssub.s32 %s17, %s24
      %p26 = scmp.eq.s32.totalorder %s25, 0
      %s28 = sadd.s32 %s27, 1
      %s29 = scalar_select %p26, %s27, %s28
      %p32 = pneg %p26
      %p33 = scmp.eq.s32.totalorder %s17, 1
      %p34 = por %p32, %p33
      %p35 = scmp.ne.s32.totalorder %s27, %s30
      %p36 = scmp.eq.s32.totalorder %s17, 0
      %p37 = por %p35, %p36
      %p38 = scmp.ne.s32.totalorder %s27, %s30
      %p39 = scmp.eq.s32.totalorder %s22, 1
      %p40 = por %p38, %p39
      %p41 = scmp.ne.s32.totalorder %s30, %s31
      %p42 = scmp.eq.s32.totalorder %s22, 0
      %p43 = por %p41, %p42
      %p44 = scmp.ne.s32.totalorder %s30, %s31
      %p45 = scmp.eq.s32.totalorder %s23, 1
      %p46 = por %p44, %p45
      %p48 = scmp.ne.s32.totalorder %s31, %s47
      %p49 = scmp.eq.s32.totalorder %s23, 0
      %p50 = por %p48, %p49
      %s52 = sadd.s32 %s51, 1
      %p55 = scmp.eq.s32.totalorder %s17, 1
      %p56 = scmp.ne.s32.totalorder %s51, %s53
      %p57 = scmp.eq.s32.totalorder %s17, 0
      %p58 = por %p56, %p57
      %p59 = scmp.ne.s32.totalorder %s51, %s53
      %p60 = scmp.eq.s32.totalorder %s22, 1
      %p61 = por %p59, %p60
      %p62 = scmp.ne.s32.totalorder %s53, %s54
      %p63 = scmp.eq.s32.totalorder %s22, 0
      %p64 = por %p62, %p63
      %p65 = scmp.ne.s32.totalorder %s53, %s54
      %p66 = scmp.eq.s32.totalorder %s23, 1
      %p67 = por %p65, %p66
      %p69 = scmp.ne.s32.totalorder %s54, %s68
      %p70 = scmp.eq.s32.totalorder %s23, 0
      %p71 = por %p69, %p70
      %s73 = sadd.s32 %s72, 1
      %p76 = scmp.eq.s32.totalorder %s17, 1
      %p77 = scmp.ne.s32.totalorder %s72, %s74
      %p78 = scmp.eq.s32.totalorder %s17, 0
      %p79 = por %p77, %p78
      %p80 = scmp.ne.s32.totalorder %s72, %s74
      %p81 = scmp.eq.s32.totalorder %s22, 1
      %p82 = por %p80, %p81
      %p83 = scmp.ne.s32.totalorder %s74, %s75
      %p84 = scmp.eq.s32.totalorder %s22, 0
      %p85 = por %p83, %p84
      %p86 = scmp.ne.s32.totalorder %s74, %s75
      %p87 = scmp.eq.s32.totalorder %s23, 1
      %p88 = por %p86, %p87
      %p90 = scmp.ne.s32.totalorder %s75, %s89
      %p91 = scmp.eq.s32.totalorder %s23, 0
      %p92 = por %p90, %p91
      %s94 = sadd.s32 %s93, 1
      %p97 = scmp.eq.s32.totalorder %s17, 1
      %p98 = scmp.ne.s32.totalorder %s93, %s95
      %p99 = scmp.eq.s32.totalorder %s17, 0
      %p100 = por %p98, %p99
      %p101 = scmp.ne.s32.totalorder %s93, %s95
      %p102 = scmp.eq.s32.totalorder %s22, 1
      %p103 = por %p101, %p102
      %p104 = scmp.ne.s32.totalorder %s95, %s96
      %p105 = scmp.eq.s32.totalorder %s22, 0
      %p106 = por %p104, %p105
      %p107 = scmp.ne.s32.totalorder %s95, %s96
      %p108 = scmp.eq.s32.totalorder %s23, 1
      %p109 = por %p107, %p108
      %p111 = scmp.ne.s32.totalorder %s96, %s110
      %p112 = scmp.eq.s32.totalorder %s23, 0
      %p113 = por %p111, %p112
      %s115 = sadd.s32 %s114, 1
      %p118 = scmp.eq.s32.totalorder %s17, 1
      %p119 = scmp.ne.s32.totalorder %s114, %s116
      %p120 = scmp.eq.s32.totalorder %s17, 0
      %p121 = por %p119, %p120
      %p122 = scmp.ne.s32.totalorder %s114, %s116
      %p123 = scmp.eq.s32.totalorder %s22, 1
      %p124 = por %p122, %p123
      %p125 = scmp.ne.s32.totalorder %s116, %s117
      %p126 = scmp.eq.s32.totalorder %s22, 0
      %p127 = por %p125, %p126
      %p128 = scmp.ne.s32.totalorder %s116, %s117
      %p129 = scmp.eq.s32.totalorder %s23, 1
      %p130 = por %p128, %p129
      %p132 = scmp.ne.s32.totalorder %s117, %s131
      %p133 = scmp.eq.s32.totalorder %s23, 0
      %p134 = por %p132, %p133
      %s136 = sadd.s32 %s135, 1
      %p139 = scmp.eq.s32.totalorder %s17, 1
      %p140 = scmp.ne.s32.totalorder %s135, %s137
      %p141 = scmp.eq.s32.totalorder %s17, 0
      %p142 = por %p140, %p141
      %p143 = scmp.ne.s32.totalorder %s135, %s137
      %p144 = scmp.eq.s32.totalorder %s22, 1
      %p145 = por %p143, %p144
      %p146 = scmp.ne.s32.totalorder %s137, %s138
      %p147 = scmp.eq.s32.totalorder %s22, 0
      %p148 = por %p146, %p147
      %p149 = scmp.ne.s32.totalorder %s137, %s138
      %p150 = scmp.eq.s32.totalorder %s23, 1
      %p151 = por %p149, %p150
      %p153 = scmp.ne.s32.totalorder %s138, %s152
      %p154 = scmp.eq.s32.totalorder %s23, 0
      %p155 = por %p153, %p154
      %s157 = sadd.s32 %s156, 1
      %p160 = scmp.eq.s32.totalorder %s17, 1
      %p161 = scmp.ne.s32.totalorder %s156, %s158
      %p162 = scmp.eq.s32.totalorder %s17, 0
      %p163 = por %p161, %p162
      %p164 = scmp.ne.s32.totalorder %s156, %s158
      %p165 = scmp.eq.s32.totalorder %s22, 1
      %p166 = por %p164, %p165
      %p167 = scmp.ne.s32.totalorder %s158, %s159
      %p168 = scmp.eq.s32.totalorder %s22, 0
      %p169 = por %p167, %p168
      %p170 = scmp.ne.s32.totalorder %s158, %s159
      %p171 = scmp.eq.s32.totalorder %s23, 1
      %p172 = por %p170, %p171
      %p174 = scmp.ne.s32.totalorder %s159, %s173
      %p175 = scmp.eq.s32.totalorder %s23, 0
      %p176 = por %p174, %p175
      %s177 = ssub.s32 %s17, %s24
      %p178 = scmp.eq.s32.totalorder %s177, 0
      %s180 = sadd.s32 %s179, 1
      %s181 = scalar_select %p178, %s179, %s180
      %p184 = pneg %p178
      %p185 = scmp.eq.s32.totalorder %s17, 1
      %p186 = por %p184, %p185
      %p187 = scmp.ne.s32.totalorder %s179, %s182
      %p188 = scmp.eq.s32.totalorder %s17, 0
      %p189 = por %p187, %p188
      %p190 = scmp.ne.s32.totalorder %s179, %s182
      %p191 = scmp.eq.s32.totalorder %s22, 1
      %p192 = por %p190, %p191
      %p193 = scmp.ne.s32.totalorder %s182, %s183
      %p194 = scmp.eq.s32.totalorder %s22, 0
      %p195 = por %p193, %p194
      %p196 = scmp.ne.s32.totalorder %s182, %s183
      %p197 = scmp.eq.s32.totalorder %s23, 1
      %p198 = por %p196, %p197
      %p200 = scmp.ne.s32.totalorder %s183, %s199
      %p201 = scmp.eq.s32.totalorder %s23, 0
      %p202 = por %p200, %p201
      %p203 = scmp.le.s32.totalorder 1, %s17
      %p204 = scmp.lt.s32.totalorder %s17, 3
      %p205 = pnand %p203, %p204
      %p206 = pneg %p205
      // Predicated region
      $region9: #{mlp_forward.1} parent=5 // pred_check
        _
      $region10: #{mlp_forward.1} parent=5 // pred_check_branch
        %208 = sbr.rel (%p205) target = $region12
      $region11: #{mlp_forward.1} parent=5 // pred_region
        %s209 = ssub.s32 %s17, 1
        // Predicated region
        $region13: #{mlp_forward.1} parent=11 // pred_check
          %p210 = pneg %p64
        $region14: #{mlp_forward.1} parent=11 // pred_check_branch
          %212 = sbr.rel (%p210) target = $region16
        $region15: #{mlp_forward.1} parent=11 // pred_region
          %214 = vsyncadd [#allocation3], 0
          %s215 = sshll.u32 %s1, 4
          %s216 = int_to_ptr.hbm [resolvable:$true] %s215
          %s217 = sshll.u32 [#allocation2], 4
          %s218 = int_to_ptr.vmem [resolvable:$true] %s217
          %223 = dma.hbm_to_vmem [thread:$0]  %s216, 512, %s218, [#allocation3], 128, 128, 8
        $region16: #{mlp_forward.1} parent=11 // pred_fallthru
          _
        // Predicated region
        $region17: #{mlp_forward.1} parent=11 // pred_check
          %p224 = pneg %p85
        $region18: #{mlp_forward.1} parent=11 // pred_check_branch
          %226 = sbr.rel (%p224) target = $region20
        $region19: #{mlp_forward.1} parent=11 // pred_region
          _
        $region20: #{mlp_forward.1} parent=11 // pred_fallthru
          _
        // Predicated region
        $region21: #{mlp_forward.1} parent=11 // pred_check
          %p227 = pneg %p106
        $region22: #{mlp_forward.1} parent=11 // pred_check_branch
          %229 = sbr.rel (%p227) target = $region24
        $region23: #{mlp_forward.1} parent=11 // pred_region
          _
        $region24: #{mlp_forward.1} parent=11 // pred_fallthru
          _
        // Predicated region
        $region25: #{mlp_forward.1} parent=11 // pred_check
          %p230 = pneg %p127
        $region26: #{mlp_forward.1} parent=11 // pred_check_branch
          %232 = sbr.rel (%p230) target = $region28
        $region27: #{mlp_forward.1} parent=11 // pred_region
          _
        $region28: #{mlp_forward.1} parent=11 // pred_fallthru
          _
        // Predicated region
        $region29: #{mlp_forward.1} parent=11 // pred_check
          %p233 = pneg %p148
        $region30: #{mlp_forward.1} parent=11 // pred_check_branch
          %235 = sbr.rel (%p233) target = $region32
        $region31: #{mlp_forward.1} parent=11 // pred_region
          _
        $region32: #{mlp_forward.1} parent=11 // pred_fallthru
          _
        // Predicated region
        $region33: #{mlp_forward.1} parent=11 // pred_check
          %p236 = pneg %p169
        $region34: #{mlp_forward.1} parent=11 // pred_check_branch
          %238 = sbr.rel (%p236) target = $region36
        $region35: #{mlp_forward.1} parent=11 // pred_region
          _
        $region36: #{mlp_forward.1} parent=11 // pred_fallthru
          _
      $region12: #{mlp_forward.1} parent=5 // pred_fallthru
        _
      %p239 = scmp.lt.s32.totalorder %s17, 2
      // Predicated region
      $region37: #{mlp_forward.1} parent=5 // pred_check
        %p240 = pneg %p239
      $region38: #{mlp_forward.1} parent=5 // pred_check_branch
        %242 = sbr.rel (%p240) target = $region40
      $region39: #{mlp_forward.1} parent=5 // pred_region
        // Predicated region
        $region41: #{mlp_forward.1} parent=39 // pred_check
          %p243 = pneg %p37
        $region42: #{mlp_forward.1} parent=39 // pred_check_branch
          %245 = sbr.rel (%p243) target = $region44
        $region43: #{mlp_forward.1} parent=39 // pred_region
          %p246 = scmp.lt.s32.totalorder %s17, 1
          %s247 = scalar_select %p246, %s17, 1
          %s248 = smul.addr %s247, 8
          %s249 = scalar_lea.vmem %s0, %s248
        $region44: #{mlp_forward.1} parent=39 // pred_fallthru
          _
      $region40: #{mlp_forward.1} parent=5 // pred_fallthru
        _
      %p250 = scmp.le.s32.totalorder 1, %s17
      %p251 = scmp.lt.s32.totalorder %s17, 3
      %p252 = pnand %p250, %p251
      %p253 = pneg %p252
      // Predicated region
      $region45: #{mlp_forward.1} parent=5 // pred_check
        _
      $region46: #{mlp_forward.1} parent=5 // pred_check_branch
        %255 = sbr.rel (%p252) target = $region48
      $region47: #{mlp_forward.1} parent=5 // pred_region
        %s256 = ssub.s32 %s17, 1
        // Predicated region
        $region49: #{mlp_forward.1} parent=47 // pred_check
          %p257 = pneg %p64
        $region50: #{mlp_forward.1} parent=47 // pred_check_branch
          %259 = sbr.rel (%p257) target = $region52
        $region51: #{mlp_forward.1} parent=47 // pred_region
          %261 = dma.done [#allocation3], 512
        $region52: #{mlp_forward.1} parent=47 // pred_fallthru
          _
        %p262 = scmp.lt.s32.totalorder %s22, 1
        %s263 = scalar_select %p262, %s22, 1
        %s264 = smul.addr %s263, 8
        %s265 = scalar_lea.vmem %s0, %s264
        %p266 = pneg %p43
        %p267 = pneg %p40
        %p268 = pneg %p64
        %p269 = pneg %p61
        %p270 = pneg %p85
        %p271 = pneg %p82
        %p272 = pneg %p106
        %p273 = pneg %p103
        %p274 = pneg %p127
        %p275 = pneg %p124
        %p276 = pneg %p148
        %p277 = pneg %p145
        %p278 = pneg %p169
        %p279 = pneg %p166
        %p280 = pneg %p195
        %p281 = pneg %p192
        %s282 = sand.u32 %s182, 1
        %s283 = scalar_lea.sflag [#allocation4], %s282
        %s284 = sand.u32 %s182, 1
        %s285 = smul.addr %s284, 8
        %s286 = scalar_lea.vmem [#allocation5], %s285
        %p287 = scmp.lt.s32.totalorder %s22, 1
        %s288 = scalar_select %p287, %s22, 1
        %s289 = smul.addr %s288, 8
        %s290 = scalar_lea.vmem %s0, %s289
        %v291 = vld [vmem:[%s290] sm:$0xff]
        %v292 = vld [vmem:[#allocation2] sm:$0xff]
        %v293 = vld [vmem:[#allocation2 + $0x8] sm:$0xff]
        %v294 = vld [vmem:[#allocation2 + $0x10] sm:$0xff]
        %v295 = vld [vmem:[#allocation2 + $0x18] sm:$0xff]
        %v296 = vld [vmem:[%s2] sm:$0x1]
        %v298 = vperm.slane %v296, 0
        %vm300 = vcmask 261120
        %v302 = vsel %vm300, %v291, 0
        %304 = vmatpush.msra.mxu0 0.0
        %305 = vmatpush.msra.mxu0 0.0
        %306 = vmatpush.msra.mxu0 0.0
        %307 = vmatpush.msra.mxu0 0.0
        %308 = vmatpush.msra.mxu0 0.0
        %309 = vmatpush.msra.mxu0 0.0
        %310 = vmatpush.msra.mxu0 0.0
        %311 = vmatpush.msra.mxu0 0.0
        %312 = vmatpush.msra.mxu0 0.0
        %313 = vmatpush.msra.mxu0 0.0
        %314 = vmatpush.msra.mxu0 0.0
        %315 = vmatpush.msra.mxu0 0.0
        %316 = vmatpush.msra.mxu0 %v295
        %317 = vmatpush.msra.mxu0 %v294
        %318 = vmatpush.msra.mxu0 %v293
        %319 = vmatpush.msra.mxu0 %v292
        %320 = vmatmul.f32.gmra.mxu0 %v302
        %v321 = vpop.f32.mrf.mxu0
        %v322 = vadd.f32 %v298, %v321
        %323 = vdwg.mxu0
        %v324 = vmax.f32 %v322, 0.0
        %v325 = vld [vmem:[%s3] sm:$0xff]
        %v326 = vld [vmem:[%s3 + $0x8] sm:$0xff]
        %v327 = vld [vmem:[%s3 + $0x10] sm:$0xff]
        %v328 = vld [vmem:[%s3 + $0x18] sm:$0xff]
        %v329 = vld [vmem:[%s3 + $0x20] sm:$0xff]
        %v330 = vld [vmem:[%s3 + $0x28] sm:$0xff]
        %v331 = vld [vmem:[%s3 + $0x30] sm:$0xff]
        %v332 = vld [vmem:[%s3 + $0x38] sm:$0xff]
        %v333 = vld [vmem:[%s4] sm:$0x1]
        %v335 = vperm.slane %v333, 0
        %vm337 = vcmask 523264
        %v339 = vsel %vm337, %v324, 0
        %341 = vmatpush.msra.mxu0 0.0
        %342 = vmatpush.msra.mxu0 0.0
        %343 = vmatpush.msra.mxu0 0.0
        %344 = vmatpush.msra.mxu0 0.0
        %345 = vmatpush.msra.mxu0 0.0
        %346 = vmatpush.msra.mxu0 0.0
        %347 = vmatpush.msra.mxu0 0.0
        %348 = vmatpush.msra.mxu0 0.0
        %349 = vmatpush.msra.mxu0 %v332
        %350 = vmatpush.msra.mxu0 %v331
        %351 = vmatpush.msra.mxu0 %v330
        %352 = vmatpush.msra.mxu0 %v329
        %353 = vmatpush.msra.mxu0 %v328
        %354 = vmatpush.msra.mxu0 %v327
        %355 = vmatpush.msra.mxu0 %v326
        %356 = vmatpush.msra.mxu0 %v325
        %357 = vmatmul.f32.gmra.mxu0 %v339
        %v358 = vpop.f32.mrf.mxu0
        %v359 = vadd.f32 %v335, %v358
        %360 = vdwg.mxu0
        %v361 = vmax.f32 %v359, 0.0
        %v362 = vld [vmem:[%s5] sm:$0xff]
        %v363 = vld [vmem:[%s5 + $0x8] sm:$0xff]
        %v364 = vld [vmem:[%s5 + $0x10] sm:$0xff]
        %v365 = vld [vmem:[%s5 + $0x18] sm:$0xff]
        %v366 = vld [vmem:[%s5 + $0x20] sm:$0xff]
        %v367 = vld [vmem:[%s5 + $0x28] sm:$0xff]
        %v368 = vld [vmem:[%s5 + $0x30] sm:$0xff]
        %v369 = vld [vmem:[%s5 + $0x38] sm:$0xff]
        %v370 = vld [vmem:[%s6] sm:$0x1]
        %v372 = vperm.slane %v370, 0
        %v375 = vsel %vm337, %v361, 0
        %377 = vmatpush.msra.mxu0 0.0
        %378 = vmatpush.msra.mxu0 0.0
        %379 = vmatpush.msra.mxu0 0.0
        %380 = vmatpush.msra.mxu0 0.0
        %381 = vmatpush.msra.mxu0 0.0
        %382 = vmatpush.msra.mxu0 0.0
        %383 = vmatpush.msra.mxu0 0.0
        %384 = vmatpush.msra.mxu0 0.0
        %385 = vmatpush.msra.mxu0 %v369
        %386 = vmatpush.msra.mxu0 %v368
        %387 = vmatpush.msra.mxu0 %v367
        %388 = vmatpush.msra.mxu0 %v366
        %389 = vmatpush.msra.mxu0 %v365
        %390 = vmatpush.msra.mxu0 %v364
        %391 = vmatpush.msra.mxu0 %v363
        %392 = vmatpush.msra.mxu0 %v362
        %393 = vmatmul.f32.gmra.mxu0 %v375
        %v394 = vpop.f32.mrf.mxu0
        %v395 = vadd.f32 %v372, %v394
        %396 = vdwg.mxu0
        %v397 = vmax.f32 %v395, 0.0
        %vm398 = vcmask 130048
        %399 = vst.msk [vmem:[%s286] sm:$0xff] %vm398, %v397
        %s400 = sand.u32 %s182, 1
        %s401 = scalar_lea.sflag [#allocation4], %s400
        %s402 = sand.u32 %s182, 1
        %s403 = smul.addr %s402, 8
        %s404 = scalar_lea.vmem [#allocation5], %s403
        // Predicated region
        $region53: #{mlp_forward.1} parent=47 // pred_check
          %p405 = pneg %p192
        $region54: #{mlp_forward.1} parent=47 // pred_check_branch
          %407 = sbr.rel (%p405) target = $region56
        $region55: #{mlp_forward.1} parent=47 // pred_region
          %409 = vsyncadd %s401, 0
          %s410 = smul.addr %s22, 8
          %s411 = scalar_lea.hbm %s7, %s410
          %s413 = sshll.u32 %s404, 4
          %s414 = int_to_ptr.vmem [resolvable:$true] %s413
          %s415 = sshll.u32 %s411, 4
          %s416 = int_to_ptr.hbm [resolvable:$true] %s415
          %418 = dma.vmem_to_hbm [thread:$0]  %s414, 128, %s416, %s401
        $region56: #{mlp_forward.1} parent=47 // pred_fallthru
          _
      $region48: #{mlp_forward.1} parent=5 // pred_fallthru
        _
      %p419 = scmp.le.s32.totalorder 2, %s17
      // Predicated region
      $region57: #{mlp_forward.1} parent=5 // pred_check
        %p420 = pneg %p419
      $region58: #{mlp_forward.1} parent=5 // pred_check_branch
        %422 = sbr.rel (%p420) target = $region60
      $region59: #{mlp_forward.1} parent=5 // pred_region
        %s423 = ssub.s32 %s17, 2
        // Predicated region
        $region61: #{mlp_forward.1} parent=59 // pred_check
          %p424 = pneg %p198
        $region62: #{mlp_forward.1} parent=59 // pred_check_branch
          %426 = sbr.rel (%p424) target = $region64
        $region63: #{mlp_forward.1} parent=59 // pred_region
          %s427 = sand.u32 %s183, 1
          %s428 = scalar_lea.sflag [#allocation4], %s427
          %s429 = sand.u32 %s183, 1
          %s430 = smul.addr %s429, 8
          %s431 = scalar_lea.vmem [#allocation5], %s430
          %433 = dma.done %s428, 128
        $region64: #{mlp_forward.1} parent=59 // pred_fallthru
          _
      $region60: #{mlp_forward.1} parent=5 // pred_fallthru
        _
    $region6: #{mlp_forward.1} parent=1 // loop_footer
      %s21 = sadd.s32 1, %s17
    $region7: #{mlp_forward.1} parent=1 // loop_footer_branch
      %16 = sbr.rel target = $region3
    $region8: #{mlp_forward.1} parent=1 // loop_exit
      _
    %434 = vsyncpa [#allocation3], 1
    %s435 = scalar_lea.sflag [#allocation3], 1
    %436 = vsyncpa %s435, 1
    %437 = vsyncpa [#allocation4], 1
    %s438 = scalar_lea.sflag [#allocation4], 1
    %439 = vsyncpa %s438, 1

</llo_original>
